<compile_context>
chip_gen: v5e
topology: v5e:2x2
jax: 0.10.0
libtpu: 0.0.40
codegen_flags: <defaults>
</compile_context>

<pallas_src>
import functools

import numpy as np
import jax
import jax.numpy as jnp
from jax import lax
from jax.experimental import pallas as pl
from jax.experimental.pallas import tpu as pltpu

TAU = 0.5
NUM_NEG_SAMPLES = 10
EPS = 1e-08
_LANE = 128
_MASK_VALUE = -1e30  # "minus infinity" for masked logsumexp (finite: no inf*0)


def _round_up(x, m):
    return (x + m - 1) // m * m


# --------------------------------------------------------------------------
# Pallas kernel: per-tile InfoNCE (MXU scores + fused multi-hot selection)
# --------------------------------------------------------------------------
def _contrastive_tile_kernel(emb_ref, pos_ref, pool_ref, idx_ref, out_ref, *,
                             inv_tau, nt_valid):
    # emb_ref:  (T, d)   train-node embedding tile (bf16/f32)
    # pos_ref:  (T, d)   positive-sample embedding tile
    # pool_ref: (n, d)   negative-embedding pool (resident, fetched once)
    # idx_ref:  (T, K)   int32 per-row negative-sample indices into the pool
    # out_ref:  (1, 1)   this tile's partial sum of InfoNCE terms
    t = pl.program_id(0)
    tile = emb_ref.shape[0]
    num_neg = idx_ref.shape[1]

    emb_raw = emb_ref[...]                                  # (T, d) compute dtype
    emb = emb_raw.astype(jnp.float32)
    pos = pos_ref[...].astype(jnp.float32)

    # positive score, UNscaled: row-wise dot (VPU mul + lane reduce), f32
    pos_u = jnp.sum(emb * pos, axis=-1, keepdims=True)                  # (T, 1)

    # all negative-pool scores on the MXU, UNscaled (1/tau hoisted off the
    # full matrix; applied only inside the max-shifted exp / (T,1) terms)
    s_all = lax.dot_general(
        emb_raw, pool_ref[...],
        dimension_numbers=(((1,), (1,)), ((), ())),
        preferred_element_type=jnp.float32)                             # (T, n)

    # fused selection: multi-hot count of the K sampled columns per row
    idx = idx_ref[...]                                                  # (T, K)
    col_ids = lax.broadcasted_iota(jnp.int32, s_all.shape, 1)           # (T, n)
    cnt = jnp.zeros(s_all.shape, jnp.float32)
    for s in range(num_neg):                                            # K compares+adds
        cnt = cnt + (col_ids == idx[:, s:s + 1]).astype(jnp.float32)

    # mask unselected columns BEFORE the exp; weight by cnt so duplicates
    # sampled with replacement are counted exactly like the reference.
    masked = jnp.where(cnt > 0.0, s_all, _MASK_VALUE)                   # (T, n)
    m_u = jnp.maximum(pos_u, jnp.max(masked, axis=-1, keepdims=True))   # (T, 1)
    p_neg = cnt * jnp.exp((masked - m_u) * inv_tau)                     # (T, n)
    denom = (jnp.exp((pos_u - m_u) * inv_tau)
             + jnp.sum(p_neg, axis=-1, keepdims=True))                  # (T, 1)
    infonce = (m_u - pos_u) * inv_tau + jnp.log(denom)                  # (T, 1)

    # mask padded rows of the last tile
    row_ids = t * tile + lax.broadcasted_iota(jnp.int32, infonce.shape, 0)
    valid = (row_ids < nt_valid).astype(jnp.float32)

    # per-tile partial -> distinct output block (megacore-parallel grid axis)
    out_ref[...] = jnp.zeros_like(out_ref) + jnp.sum(infonce * valid)


def _pool_block_spec(n_pool, d):
    # The pool's index_map is constant; a second pipeline buffer is waste.
    # Request single-buffering when the running JAX supports pipeline_mode.
    try:
        return pl.BlockSpec((n_pool, d), lambda i: (0, 0),
                            pipeline_mode=pl.Buffered(1))
    except Exception:
        return pl.BlockSpec((n_pool, d), lambda i: (0, 0))


def _run_kernel(emb_train, pos_emb, neg_pool, neg_idx, *, tau=TAU,
                max_tile=256, compute_dtype=jnp.bfloat16):
    """Returns (sum_i infonce_i, rounded arrays used by the kernel)."""
    nt, d = emb_train.shape
    n_pool = neg_pool.shape[0]
    num_neg = neg_idx.shape[1]

    # bf16 packs 16 sublanes/vreg -> row tile multiple of 16; cap at 256 so
    # the f32 (tile, n_pool) score intermediate + resident pool fit v7x's
    # 64 MiB VMEM (v5e/v6e have extra headroom).
    sub = 16 if jnp.dtype(compute_dtype).itemsize < 4 else 8
    tile = min(_round_up(nt, sub), max_tile)
    padded_nt = _round_up(nt, tile)
    n_tiles = padded_nt // tile

    # pad d (MXU contraction dim) and n_pool (lane dim of s_all) to 128 ->
    # lane-dense vregs and unmasked vld/vst; zero padding never changes the
    # dot products and padded pool columns are never selected.
    d_p = _round_up(d, _LANE)
    n_pool_p = _round_up(n_pool, _LANE)
    # TODO(synk): for very large pools, chunk the pool (inner pipelined loop
    # with running max/sum) instead of keeping it fully resident in VMEM.

    def pad2(a, rows, cols):
        out = np.zeros((rows, cols), np.float32)
        out[:a.shape[0], :a.shape[1]] = a
        return out

    emb_p = jnp.asarray(pad2(emb_train, padded_nt, d_p), compute_dtype)
    pos_p = jnp.asarray(pad2(pos_emb, padded_nt, d_p), compute_dtype)
    pool_p = jnp.asarray(pad2(np.asarray(neg_pool, np.float32), n_pool_p, d_p),
                         compute_dtype)
    idx_np = np.zeros((padded_nt, num_neg), np.int32)   # padded rows -> pool 0,
    idx_np[:nt] = neg_idx                               # masked out in-kernel
    idx_p = jnp.asarray(idx_np)

    grid_spec = pltpu.PrefetchScalarGridSpec(
        num_scalar_prefetch=0,
        grid=(n_tiles,),
        in_specs=[
            pl.BlockSpec((tile, d_p), lambda i: (i, 0)),        # emb tile
            pl.BlockSpec((tile, d_p), lambda i: (i, 0)),        # positive tile
            _pool_block_spec(n_pool_p, d_p),                    # resident pool
            pl.BlockSpec((tile, num_neg), lambda i: (i, 0)),    # sampled indices
        ],
        out_specs=pl.BlockSpec((1, 1), lambda i: (i, 0)),       # per-tile partial
    )

    partials = pl.pallas_call(
        functools.partial(_contrastive_tile_kernel, inv_tau=1.0 / tau,
                          nt_valid=nt),
        out_shape=jax.ShapeDtypeStruct((n_tiles, 1), jnp.float32),
        grid_spec=grid_spec,
        compiler_params=pltpu.CompilerParams(
            dimension_semantics=("parallel",),       # shard tiles across TCs (v7x)
            vmem_limit_bytes=32 * 1024 * 1024),
    )(emb_p, pos_p, pool_p, idx_p)

    contrast_sum = jnp.sum(partials)

    used = (np.asarray(emb_p[:nt, :d].astype(jnp.float32)),
            np.asarray(pos_p[:nt, :d].astype(jnp.float32)),
            np.asarray(pool_p[:n_pool, :d].astype(jnp.float32)))
    return contrast_sum, used


# --------------------------------------------------------------------------
# Host-side glue (mirrors the PyTorch module's non-tensor-math bookkeeping)
# --------------------------------------------------------------------------
def _kmeans(x, k, iters=25):
    # TODO(synk): reference uses an external `Clusterer` (undefined in the
    # module) + scipy entropy; a deterministic numpy Lloyd's KMeans stands in.
    x = np.asarray(x, np.float64)
    centroids = x[:k].copy()
    for _ in range(iters):
        d2 = ((x[:, None, :] - centroids[None, :, :]) ** 2).sum(-1)
        labels = d2.argmin(1)
        for c in range(k):
            pts = x[labels == c]
            if len(pts) > 0:
                centroids[c] = pts.mean(0)
    d2 = ((x[:, None, :] - centroids[None, :, :]) ** 2).sum(-1)
    labels = d2.argmin(1)
    dists = np.sqrt(d2[np.arange(len(x)), labels])
    return labels, dists


def _embedding_node_importance(embeddings, num_classes):
    labels, dists = _kmeans(embeddings, num_classes)
    sum_d = dists.sum()
    inf_e = []
    for i in range(len(dists)):
        cluster_size = int((labels == labels[i]).sum())
        inf_e.append(cluster_size * dists[i] / sum_d)
    return np.array(inf_e)


def _calculate_lf_agreement(lfs, num_classes):
    lfs = np.array(lfs, dtype=str)
    ents = []
    for row in lfs:
        counts = np.unique(row, return_counts=True)[1].astype(np.float64)
        p = counts / counts.sum()
        ents.append(-(p * np.log(p)).sum())
    upper = np.log(num_classes)
    return np.array([upper - e for e in ents])


def _calculate_final_weights(embeddings, weak_labels, num_classes):
    inf_e = _embedding_node_importance(embeddings, num_classes)
    E = _calculate_lf_agreement(weak_labels, num_classes)
    return (E * inf_e).astype(np.float32)


def contrastive_loss_forward(weak_labels, embeddings, preds, mv_labels,
                             community_pos_options, train_mask,
                             weak_label_pos_options, weak_label_neg_options,
                             negative_embeddings, iter_n, num_classes,
                             positive_score, negative_score, rng,
                             compute_dtype=jnp.bfloat16):
    embeddings = np.asarray(embeddings, np.float32)
    negative_embeddings = np.asarray(negative_embeddings, np.float32)
    preds = np.asarray(preds, np.float32)
    mv_labels = np.asarray(mv_labels, np.int64)

    emb_train = embeddings[train_mask]                          # (nt, d)
    nt = emb_train.shape[0]
    pos_emb = emb_train[np.asarray(weak_label_pos_options)]     # (nt, d)

    # per-(node, slot) negative indices — only int32 indices go to the device
    neg_idx = np.stack(
        [rng.choice(negative_embeddings.shape[0], size=nt)
         for _ in range(NUM_NEG_SAMPLES)], axis=1).astype(np.int32)  # (nt, K)

    # NLL * node-weight term: pure host-side numpy, stays off the device.
    labels_train = mv_labels[train_mask]
    preds_train = preds[train_mask]
    nll = -preds_train[np.arange(nt), labels_train]             # (nt,)
    node_w = _calculate_final_weights(embeddings, weak_labels, num_classes)[train_mask]
    labels_loss = np.float32(np.mean(nll * node_w))

    contrast_sum, used = _run_kernel(emb_train, pos_emb, negative_embeddings,
                                     neg_idx, compute_dtype=compute_dtype)

    # tiny community term stays outside the gridded kernel
    community = -jnp.mean(
        jnp.log(jnp.asarray(positive_score, jnp.float32) + EPS) +
        jnp.log(1.0 - jnp.asarray(negative_score, jnp.float32) + EPS))

    loss = contrast_sum / np.float32(nt) + labels_loss + community

    emb_r, pos_r, pool_r = used
    return loss, (emb_r, pos_r, pool_r, neg_idx, preds_train, labels_train, node_w)


# --------------------------------------------------------------------------
# Pure-numpy reference (same math, from the same rounded inputs)
# --------------------------------------------------------------------------
def _reference_loss(emb_r, pos_r, pool_r, neg_idx, preds_train, labels_train,
                    node_w, pos_score, neg_score, tau=TAU):
    nt = emb_r.shape[0]
    samples = np.concatenate(
        [pos_r[:, None, :], pool_r[neg_idx]], axis=1).astype(np.float64)  # (nt,1+K,d)
    scores = (emb_r[:, None, :].astype(np.float64) * samples).sum(-1) / tau
    m = scores.max(-1, keepdims=True)
    lse = (m + np.log(np.exp(scores - m).sum(-1, keepdims=True)))[:, 0]
    infonce = lse - scores[:, 0]
    weak = infonce.mean()

    nll = -preds_train[np.arange(nt), labels_train].astype(np.float64)
    labels_loss = (nll * node_w.astype(np.float64)).mean()

    community = -(np.log(pos_score.astype(np.float64) + EPS) +
                  np.log(1.0 - neg_score.astype(np.float64) + EPS)).mean()
    return community + labels_loss + weak


# --------------------------------------------------------------------------
# Main
# --------------------------------------------------------------------------
if __name__ == "__main__":
    n, d, m, c, P = 16, 32, 4, 3, 8            # nodes, emb dim, LFs, classes, scores
    key = jax.random.PRNGKey(0)
    k1, k2, k3, k4, k5 = jax.random.split(key, 5)

    embeddings = np.asarray(jax.random.normal(k1, (n, d)), np.float32)
    negative_embeddings = np.asarray(jax.random.normal(k2, (n, d)), np.float32)
    preds = np.asarray(jax.nn.log_softmax(jax.random.normal(k3, (n, c)), axis=-1),
                       np.float32)
    positive_score = np.asarray(jax.random.uniform(k4, (P,), minval=0.05, maxval=0.95),
                                np.float32)
    negative_score = np.asarray(jax.random.uniform(k5, (P,), minval=0.05, maxval=0.95),
                                np.float32)

    rng = np.random.RandomState(0)
    weak_labels = rng.randint(0, c, size=(n, m))
    mv_labels = rng.randint(0, c, size=(n,))
    train_mask = np.arange(0, n, 2)                     # nt = 8 train nodes
    nt = len(train_mask)
    weak_label_pos_options = rng.randint(0, nt, size=(nt,))
    weak_label_neg_options = rng.randint(0, n, size=(nt, 5))   # unused by forward path
    community_pos_options = rng.randint(0, n, size=(n, 4))     # unused by forward path
    iter_n, num_classes = 1, c

    sample_rng = np.random.RandomState(1234)
    loss, packed = contrastive_loss_forward(
        weak_labels, embeddings, preds, mv_labels, community_pos_options,
        train_mask, weak_label_pos_options, weak_label_neg_options,
        negative_embeddings, iter_n, num_classes, positive_score, negative_score,
        sample_rng)
    loss = jax.block_until_ready(loss)

    emb_r, pos_r, pool_r, neg_idx, preds_train, labels_train, node_w = packed
    ref = _reference_loss(emb_r, pos_r, pool_r, neg_idx, preds_train,
                          labels_train, node_w, positive_score, negative_score)

    if np.allclose(np.asarray(loss, np.float64), ref, rtol=1e-3, atol=1e-4):
        print("KERNEL_OK")
    else:
        print("MISMATCH", float(loss), float(ref))
</pallas_src>

<mosaic_0001>
module attributes {stable_mosaic.version = 11 : i64} {
  func.func @_contrastive_tile_kernel(%arg0: i32, %arg1: memref<16x128xbf16, #tpu.memory_space<vmem>>, %arg2: memref<16x128xbf16, #tpu.memory_space<vmem>>, %arg3: memref<128x128xbf16, #tpu.memory_space<vmem>>, %arg4: memref<16x10xi32, #tpu.memory_space<vmem>>, %arg5: memref<1x1xf32, #tpu.memory_space<vmem>>) attributes {dimension_semantics = [#tpu.dimension_semantics<parallel>], iteration_bounds = array<i64: 1>, scalar_prefetch = 0 : i64, scratch_operands = 0 : i64, tpu.core_type = #tpu.core_type<tc>, window_params = [{transform_indices = @transform_0, window_bounds = array<i64: 16, 128>}, {transform_indices = @transform_1, window_bounds = array<i64: 16, 128>}, {pipeline_mode = #tpu.pipeline_mode<synchronous>, transform_indices = @transform_2, window_bounds = array<i64: 128, 128>}, {transform_indices = @transform_3, window_bounds = array<i64: 16, 10>}, {transform_indices = @transform_4, window_bounds = array<i64: 1, 1>}]} {
    %c0 = arith.constant 0 : index
    %c0_0 = arith.constant 0 : index
    %0 = vector.load %arg1[%c0, %c0_0] : memref<16x128xbf16, #tpu.memory_space<vmem>>, vector<16x128xbf16>
    %1 = arith.extf %0 : vector<16x128xbf16> to vector<16x128xf32>
    %c0_1 = arith.constant 0 : index
    %c0_2 = arith.constant 0 : index
    %2 = vector.load %arg2[%c0_1, %c0_2] : memref<16x128xbf16, #tpu.memory_space<vmem>>, vector<16x128xbf16>
    %3 = arith.extf %2 : vector<16x128xbf16> to vector<16x128xf32>
    %4 = arith.mulf %1, %3 : vector<16x128xf32>
    %cst = arith.constant dense<0.000000e+00> : vector<16xf32>
    %5 = vector.multi_reduction <add>, %4, %cst [1] : vector<16x128xf32> to vector<16xf32>
    %6 = vector.shape_cast %5 : vector<16xf32> to vector<16x1xf32>
    %c0_3 = arith.constant 0 : index
    %c0_4 = arith.constant 0 : index
    %7 = vector.load %arg3[%c0_3, %c0_4] : memref<128x128xbf16, #tpu.memory_space<vmem>>, vector<128x128xbf16>
    %cst_5 = arith.constant dense<0.000000e+00> : vector<16x128xf32>
    %8 = tpu.matmul %0, %7, %cst_5 {dimension_numbers = #tpu.dot_dimension_numbers<[1], [1], [0], [0], [0, 0, 1, 0], [], []>} : vector<16x128xbf16>, vector<128x128xbf16>, vector<16x128xf32> -> vector<16x128xf32>
    %c0_6 = arith.constant 0 : index
    %c0_7 = arith.constant 0 : index
    %9 = vector.load %arg4[%c0_6, %c0_7] : memref<16x10xi32, #tpu.memory_space<vmem>>, vector<16x10xi32>
    %10 = tpu.iota {dimensions = array<i32: 1>} : vector<16x128xi32>
    %cst_8 = arith.constant 0.000000e+00 : f32
    %11 = vector.broadcast %cst_8 : f32 to vector<16x128xf32>
    %12 = vector.extract_strided_slice %9 {offsets = [0, 0], sizes = [16, 1], strides = [1, 1]} : vector<16x10xi32> to vector<16x1xi32>
    %13 = vector.broadcast %12 : vector<16x1xi32> to vector<16x128xi32>
    %14 = arith.cmpi eq, %10, %13 : vector<16x128xi32>
    %15 = arith.extui %14 : vector<16x128xi1> to vector<16x128xi32>
    %16 = arith.sitofp %15 : vector<16x128xi32> to vector<16x128xf32>
    %17 = arith.addf %11, %16 : vector<16x128xf32>
    %18 = vector.extract_strided_slice %9 {offsets = [0, 1], sizes = [16, 1], strides = [1, 1]} : vector<16x10xi32> to vector<16x1xi32>
    %19 = vector.broadcast %18 : vector<16x1xi32> to vector<16x128xi32>
    %20 = arith.cmpi eq, %10, %19 : vector<16x128xi32>
    %21 = arith.extui %20 : vector<16x128xi1> to vector<16x128xi32>
    %22 = arith.sitofp %21 : vector<16x128xi32> to vector<16x128xf32>
    %23 = arith.addf %17, %22 : vector<16x128xf32>
    %24 = vector.extract_strided_slice %9 {offsets = [0, 2], sizes = [16, 1], strides = [1, 1]} : vector<16x10xi32> to vector<16x1xi32>
    %25 = vector.broadcast %24 : vector<16x1xi32> to vector<16x128xi32>
    %26 = arith.cmpi eq, %10, %25 : vector<16x128xi32>
    %27 = arith.extui %26 : vector<16x128xi1> to vector<16x128xi32>
    %28 = arith.sitofp %27 : vector<16x128xi32> to vector<16x128xf32>
    %29 = arith.addf %23, %28 : vector<16x128xf32>
    %30 = vector.extract_strided_slice %9 {offsets = [0, 3], sizes = [16, 1], strides = [1, 1]} : vector<16x10xi32> to vector<16x1xi32>
    %31 = vector.broadcast %30 : vector<16x1xi32> to vector<16x128xi32>
    %32 = arith.cmpi eq, %10, %31 : vector<16x128xi32>
    %33 = arith.extui %32 : vector<16x128xi1> to vector<16x128xi32>
    %34 = arith.sitofp %33 : vector<16x128xi32> to vector<16x128xf32>
    %35 = arith.addf %29, %34 : vector<16x128xf32>
    %36 = vector.extract_strided_slice %9 {offsets = [0, 4], sizes = [16, 1], strides = [1, 1]} : vector<16x10xi32> to vector<16x1xi32>
    %37 = vector.broadcast %36 : vector<16x1xi32> to vector<16x128xi32>
    %38 = arith.cmpi eq, %10, %37 : vector<16x128xi32>
    %39 = arith.extui %38 : vector<16x128xi1> to vector<16x128xi32>
    %40 = arith.sitofp %39 : vector<16x128xi32> to vector<16x128xf32>
    %41 = arith.addf %35, %40 : vector<16x128xf32>
    %42 = vector.extract_strided_slice %9 {offsets = [0, 5], sizes = [16, 1], strides = [1, 1]} : vector<16x10xi32> to vector<16x1xi32>
    %43 = vector.broadcast %42 : vector<16x1xi32> to vector<16x128xi32>
    %44 = arith.cmpi eq, %10, %43 : vector<16x128xi32>
    %45 = arith.extui %44 : vector<16x128xi1> to vector<16x128xi32>
    %46 = arith.sitofp %45 : vector<16x128xi32> to vector<16x128xf32>
    %47 = arith.addf %41, %46 : vector<16x128xf32>
    %48 = vector.extract_strided_slice %9 {offsets = [0, 6], sizes = [16, 1], strides = [1, 1]} : vector<16x10xi32> to vector<16x1xi32>
    %49 = vector.broadcast %48 : vector<16x1xi32> to vector<16x128xi32>
    %50 = arith.cmpi eq, %10, %49 : vector<16x128xi32>
    %51 = arith.extui %50 : vector<16x128xi1> to vector<16x128xi32>
    %52 = arith.sitofp %51 : vector<16x128xi32> to vector<16x128xf32>
    %53 = arith.addf %47, %52 : vector<16x128xf32>
    %54 = vector.extract_strided_slice %9 {offsets = [0, 7], sizes = [16, 1], strides = [1, 1]} : vector<16x10xi32> to vector<16x1xi32>
    %55 = vector.broadcast %54 : vector<16x1xi32> to vector<16x128xi32>
    %56 = arith.cmpi eq, %10, %55 : vector<16x128xi32>
    %57 = arith.extui %56 : vector<16x128xi1> to vector<16x128xi32>
    %58 = arith.sitofp %57 : vector<16x128xi32> to vector<16x128xf32>
    %59 = arith.addf %53, %58 : vector<16x128xf32>
    %60 = vector.extract_strided_slice %9 {offsets = [0, 8], sizes = [16, 1], strides = [1, 1]} : vector<16x10xi32> to vector<16x1xi32>
    %61 = vector.broadcast %60 : vector<16x1xi32> to vector<16x128xi32>
    %62 = arith.cmpi eq, %10, %61 : vector<16x128xi32>
    %63 = arith.extui %62 : vector<16x128xi1> to vector<16x128xi32>
    %64 = arith.sitofp %63 : vector<16x128xi32> to vector<16x128xf32>
    %65 = arith.addf %59, %64 : vector<16x128xf32>
    %66 = vector.extract_strided_slice %9 {offsets = [0, 9], sizes = [16, 1], strides = [1, 1]} : vector<16x10xi32> to vector<16x1xi32>
    %67 = vector.broadcast %66 : vector<16x1xi32> to vector<16x128xi32>
    %68 = arith.cmpi eq, %10, %67 : vector<16x128xi32>
    %69 = arith.extui %68 : vector<16x128xi1> to vector<16x128xi32>
    %70 = arith.sitofp %69 : vector<16x128xi32> to vector<16x128xf32>
    %71 = arith.addf %65, %70 : vector<16x128xf32>
    %cst_9 = arith.constant 0.000000e+00 : f32
    %72 = vector.broadcast %cst_9 : f32 to vector<16x128xf32>
    %73 = arith.cmpf ogt, %71, %72 : vector<16x128xf32>
    %cst_10 = arith.constant -1.000000e+30 : f32
    %74 = vector.broadcast %cst_10 : f32 to vector<16x128xf32>
    %75 = arith.select %73, %8, %74 : vector<16x128xi1>, vector<16x128xf32>
    %cst_11 = arith.constant dense<0xFF800000> : vector<16xf32>
    %76 = vector.multi_reduction <maximumf>, %75, %cst_11 [1] : vector<16x128xf32> to vector<16xf32>
    %77 = vector.shape_cast %76 : vector<16xf32> to vector<16x1xf32>
    %78 = arith.maximumf %6, %77 : vector<16x1xf32>
    %79 = vector.broadcast %78 : vector<16x1xf32> to vector<16x128xf32>
    %80 = arith.subf %75, %79 : vector<16x128xf32>
    %cst_12 = arith.constant 2.000000e+00 : f32
    %81 = vector.broadcast %cst_12 : f32 to vector<16x128xf32>
    %82 = arith.mulf %80, %81 : vector<16x128xf32>
    %83 = math.exp %82 : vector<16x128xf32>
    %84 = arith.mulf %71, %83 : vector<16x128xf32>
    %85 = arith.subf %6, %78 : vector<16x1xf32>
    %cst_13 = arith.constant 2.000000e+00 : f32
    %86 = vector.broadcast %cst_13 : f32 to vector<16x1xf32>
    %87 = arith.mulf %85, %86 : vector<16x1xf32>
    %88 = math.exp %87 : vector<16x1xf32>
    %cst_14 = arith.constant dense<0.000000e+00> : vector<16xf32>
    %89 = vector.multi_reduction <add>, %84, %cst_14 [1] : vector<16x128xf32> to vector<16xf32>
    %90 = vector.shape_cast %89 : vector<16xf32> to vector<16x1xf32>
    %91 = arith.addf %88, %90 : vector<16x1xf32>
    %92 = arith.subf %78, %6 : vector<16x1xf32>
    %cst_15 = arith.constant 2.000000e+00 : f32
    %93 = vector.broadcast %cst_15 : f32 to vector<16x1xf32>
    %94 = arith.mulf %92, %93 : vector<16x1xf32>
    %95 = math.log %91 : vector<16x1xf32>
    %96 = arith.addf %94, %95 : vector<16x1xf32>
    %c16_i32 = arith.constant 16 : i32
    %97 = arith.muli %arg0, %c16_i32 : i32
    %98 = tpu.iota {dimensions = array<i32: 0>} : vector<16x1xi32>
    %99 = vector.broadcast %97 : i32 to vector<16x1xi32>
    %100 = arith.addi %99, %98 : vector<16x1xi32>
    %c8_i32 = arith.constant 8 : i32
    %101 = vector.broadcast %c8_i32 : i32 to vector<16x1xi32>
    %102 = arith.cmpi slt, %100, %101 : vector<16x1xi32>
    %103 = arith.extui %102 : vector<16x1xi1> to vector<16x1xi32>
    %104 = arith.sitofp %103 : vector<16x1xi32> to vector<16x1xf32>
    %cst_16 = arith.constant 0.000000e+00 : f32
    %105 = vector.broadcast %cst_16 : f32 to vector<1x1xf32>
    %106 = arith.mulf %96, %104 : vector<16x1xf32>
    %107 = vector.shape_cast %106 : vector<16x1xf32> to vector<1x16x1xf32>
    %cst_17 = arith.constant dense<0.000000e+00> : vector<1xf32>
    %108 = vector.multi_reduction <add>, %107, %cst_17 [1, 2] : vector<1x16x1xf32> to vector<1xf32>
    %109 = vector.shape_cast %108 : vector<1xf32> to vector<1x1x1xf32>
    %110 = vector.extract %109[0, 0, 0] : f32 from vector<1x1x1xf32>
    %111 = vector.broadcast %110 : f32 to vector<1x1xf32>
    %112 = arith.addf %105, %111 : vector<1x1xf32>
    %c0_18 = arith.constant 0 : index
    %c0_19 = arith.constant 0 : index
    %113 = vector.load %arg5[%c0_18, %c0_19] : memref<1x1xf32, #tpu.memory_space<vmem>>, vector<1x1xf32>
    tpu.vector_store %arg5[%c0_18, %c0_19], %112 {strides = array<i32>} : memref<1x1xf32, #tpu.memory_space<vmem>>, vector<1x1xf32>,
    return
  }
  func.func @transform_0(%arg0: i32) -> (i32, i32) {
    %c0_i32 = arith.constant 0 : i32
    %c0_i32_0 = arith.constant 0 : i32
    return %arg0, %c0_i32 : i32, i32
  }
  func.func @transform_1(%arg0: i32) -> (i32, i32) {
    %c0_i32 = arith.constant 0 : i32
    %c0_i32_0 = arith.constant 0 : i32
    return %arg0, %c0_i32 : i32, i32
  }
  func.func @transform_2(%arg0: i32) -> (i32, i32) {
    %c0_i32 = arith.constant 0 : i32
    %c0_i32_0 = arith.constant 0 : i32
    %c0_i32_1 = arith.constant 0 : i32
    return %c0_i32, %c0_i32_0 : i32, i32
  }
  func.func @transform_3(%arg0: i32) -> (i32, i32) {
    %c0_i32 = arith.constant 0 : i32
    %c0_i32_0 = arith.constant 0 : i32
    return %arg0, %c0_i32 : i32, i32
  }
  func.func @transform_4(%arg0: i32) -> (i32, i32) {
    %c0_i32 = arith.constant 0 : i32
    %c0_i32_0 = arith.constant 0 : i32
    return %arg0, %c0_i32 : i32, i32
  }
}

</mosaic_0001>

<llo_original>
// kernel: tpu_custom_call.1
$region0: #{tpu_custom_call.1}
  #allocation0 [shape = 'u32[]', space=smem, size = 0x4, offset = 0x4, fixed_abs, tag = 'smem constant byte address 0x4 - core index']
  #allocation1 [shape = 'u32[72,128]{1,0:T(1,128)}', space=vmem, size = 0x9000, scoped, tag = 'internal scratch']
  %s0 = inlined_call_operand.hbm [shape: bf16[16,128], index: 0, kind: input, shape index: {}]
  %s1 = inlined_call_operand.hbm [shape: bf16[16,128], index: 1, kind: input, shape index: {}]
  %s2 = inlined_call_operand.hbm [shape: bf16[128,128], index: 2, kind: input, shape index: {}]
  %s3 = inlined_call_operand.hbm [shape: s32[16,10], index: 3, kind: input, shape index: {}]
  %s4 = inlined_call_operand.hbm [shape: f32[1,1], index: 4, kind: output, shape index: {}]
  %s5 = sld [smem:[#allocation0]]
  $region42: #{tpu_custom_call.1} parent=0
    _
  %s7 = ssub.s32 1, %s5
  %s8 = scalar_select 0, %s7, %s5
  $region1: #{tpu_custom_call.1} parent=0
    #allocation2 [shape = 'u8[4096]{0}', space=vmem, size = 0x1000, scoped, tag = 'input window, operand 0, single buffered']
    #allocation3 [shape = 's32[1]{0}', space=sflag, size = 0x4, scoped, tag = 'scoped memory for tpu_custom_call.1']
    #allocation4 [shape = 's32[1]{0}', space=sflag, size = 0x4, scoped, tag = 'scoped memory for tpu_custom_call.1']
    #allocation5 [shape = 'u8[4096]{0}', space=vmem, size = 0x1000, scoped, tag = 'input window, operand 1, single buffered']
    #allocation6 [shape = 's32[1]{0}', space=sflag, size = 0x4, scoped, tag = 'scoped memory for tpu_custom_call.1']
    #allocation7 [shape = 'u8[32768]{0}', space=vmem, size = 0x8000, scoped, tag = 'input window, operand 2, single buffered']
    #allocation8 [shape = 'u8[8192]{0}', space=vmem, size = 0x2000, scoped, tag = 'input window, operand 3, single buffered']
    #allocation9 [shape = 's32[1]{0}', space=sflag, size = 0x4, scoped, tag = 'scoped memory for tpu_custom_call.1']
    #allocation10 [shape = 'u8[512]{0}', space=vmem, size = 0x400, scoped, tag = 'output window, operand 0, single buffered']
    %9 = vsyncpa [#allocation3], 0
    %10 = vsyncpa [#allocation6], 0
    %11 = vsyncpa [#allocation9], 0
    %12 = vsyncpa [#allocation4], 0
    // Predicated region
    $region2: #{tpu_custom_call.1} parent=1 // pred_check
      _
    $region3: #{tpu_custom_call.1} parent=1 // pred_check_branch
      %14 = sbr.rel (0) target = $region5
    $region4: #{tpu_custom_call.1} parent=1 // pred_region
      %16 = vsyncadd [#allocation3], 0
      %s17 = sshll.u32 %s0, 4
      %s18 = int_to_ptr.hbm [resolvable:$true] %s17
      %s19 = sshll.u32 [#allocation2], 4
      %s20 = int_to_ptr.vmem [resolvable:$true] %s19
      %25 = dma.hbm_to_vmem [thread:$0]  %s18, 128, %s20, [#allocation3], 64, 64, 4
    $region5: #{tpu_custom_call.1} parent=1 // pred_fallthru
      _
    // Predicated region
    $region6: #{tpu_custom_call.1} parent=1 // pred_check
      _
    $region7: #{tpu_custom_call.1} parent=1 // pred_check_branch
      %27 = sbr.rel (0) target = $region9
    $region8: #{tpu_custom_call.1} parent=1 // pred_region
      %29 = vsyncadd [#allocation6], 0
      %s30 = sshll.u32 %s1, 4
      %s31 = int_to_ptr.hbm [resolvable:$true] %s30
      %s32 = sshll.u32 [#allocation5], 4
      %s33 = int_to_ptr.vmem [resolvable:$true] %s32
      %38 = dma.hbm_to_vmem [thread:$0]  %s31, 128, %s33, [#allocation6], 64, 64, 4
    $region9: #{tpu_custom_call.1} parent=1 // pred_fallthru
      _
    // Predicated region
    $region10: #{tpu_custom_call.1} parent=1 // pred_check
      _
    $region11: #{tpu_custom_call.1} parent=1 // pred_check_branch
      %40 = sbr.rel (0) target = $region13
    $region12: #{tpu_custom_call.1} parent=1 // pred_region
      %42 = vsyncadd [#allocation6], 0
      %s43 = sshll.u32 %s2, 4
      %s44 = int_to_ptr.hbm [resolvable:$true] %s43
      %s45 = sshll.u32 [#allocation7], 4
      %s46 = int_to_ptr.vmem [resolvable:$true] %s45
      %51 = dma.hbm_to_vmem [thread:$0]  %s44, 1024, %s46, [#allocation6], 64, 64, 4
    $region13: #{tpu_custom_call.1} parent=1 // pred_fallthru
      _
    // Predicated region
    $region14: #{tpu_custom_call.1} parent=1 // pred_check
      _
    $region15: #{tpu_custom_call.1} parent=1 // pred_check_branch
      %53 = sbr.rel (0) target = $region17
    $region16: #{tpu_custom_call.1} parent=1 // pred_region
      %55 = vsyncadd [#allocation9], 0
      %s56 = sshll.u32 %s3, 4
      %s57 = int_to_ptr.hbm [resolvable:$true] %s56
      %s58 = sshll.u32 [#allocation8], 4
      %s59 = int_to_ptr.vmem [resolvable:$true] %s58
      %64 = dma.hbm_to_vmem [thread:$0]  %s57, 256, %s59, [#allocation9], 128, 128, 8
    $region17: #{tpu_custom_call.1} parent=1 // pred_fallthru
      _
    // Predicated region
    $region18: #{tpu_custom_call.1} parent=1 // pred_check
      _
    $region19: #{tpu_custom_call.1} parent=1 // pred_check_branch
      %66 = sbr.rel (0) target = $region21
    $region20: #{tpu_custom_call.1} parent=1 // pred_region
      %68 = dma.done [#allocation3], 128
    $region21: #{tpu_custom_call.1} parent=1 // pred_fallthru
      _
    // Predicated region
    $region22: #{tpu_custom_call.1} parent=1 // pred_check
      _
    $region23: #{tpu_custom_call.1} parent=1 // pred_check_branch
      %70 = sbr.rel (0) target = $region25
    $region24: #{tpu_custom_call.1} parent=1 // pred_region
      %72 = dma.done [#allocation6], 128
    $region25: #{tpu_custom_call.1} parent=1 // pred_fallthru
      _
    // Predicated region
    $region26: #{tpu_custom_call.1} parent=1 // pred_check
      _
    $region27: #{tpu_custom_call.1} parent=1 // pred_check_branch
      %74 = sbr.rel (0) target = $region29
    $region28: #{tpu_custom_call.1} parent=1 // pred_region
      %76 = dma.done [#allocation6], 1024
    $region29: #{tpu_custom_call.1} parent=1 // pred_fallthru
      _
    // Predicated region
    $region30: #{tpu_custom_call.1} parent=1 // pred_check
      _
    $region31: #{tpu_custom_call.1} parent=1 // pred_check_branch
      %78 = sbr.rel (0) target = $region33
    $region32: #{tpu_custom_call.1} parent=1 // pred_region
      %80 = dma.done [#allocation9], 256
    $region33: #{tpu_custom_call.1} parent=1 // pred_fallthru
      _
    %v81 = vld [vmem:[#allocation2] sm:$0xf]
    %v82 = vld [vmem:[#allocation2 + $0x4] sm:$0xf]
    %v83 = vunpack.c.l.bf16 %v81
    %v84 = vunpack.c.l.bf16 %v82
    %v85 = vld [vmem:[#allocation5] sm:$0xf]
    %v86 = vld [vmem:[#allocation5 + $0x4] sm:$0xf]
    %v87 = vunpack.c.l.bf16 %v85
    %v88 = vunpack.c.l.bf16 %v86
    %v89 = vmul.f32 %v83, %v87
    %v90 = vmul.f32 %v84, %v88
    %91 = vadd.xlane.f32.xlu0 %v89
    %v92 = vpop.xlane.xlu0 %91
    %93 = vadd.xlane.f32.xlu0 %v90
    %v94 = vpop.xlane.xlu0 %93
    %v95 = vld [vmem:[#allocation7] sm:$0xf]
    %v96 = vld [vmem:[#allocation7 + $0x4] sm:$0xf]
    %v97 = vld [vmem:[#allocation7 + $0x8] sm:$0xf]
    %v98 = vld [vmem:[#allocation7 + $0xc] sm:$0xf]
    %v99 = vld [vmem:[#allocation7 + $0x10] sm:$0xf]
    %v100 = vld [vmem:[#allocation7 + $0x14] sm:$0xf]
    %v101 = vld [vmem:[#allocation7 + $0x18] sm:$0xf]
    %v102 = vld [vmem:[#allocation7 + $0x1c] sm:$0xf]
    %v103 = vld [vmem:[#allocation7 + $0x20] sm:$0xf]
    %v104 = vld [vmem:[#allocation7 + $0x24] sm:$0xf]
    %v105 = vld [vmem:[#allocation7 + $0x28] sm:$0xf]
    %v106 = vld [vmem:[#allocation7 + $0x2c] sm:$0xf]
    %v107 = vld [vmem:[#allocation7 + $0x30] sm:$0xf]
    %v108 = vld [vmem:[#allocation7 + $0x34] sm:$0xf]
    %v109 = vld [vmem:[#allocation7 + $0x38] sm:$0xf]
    %v110 = vld [vmem:[#allocation7 + $0x3c] sm:$0xf]
    %v113 = vunpack.c.l.b16 %v81
    %v114 = vunpack.c.l.b16 %v82
    %v115 = vpack.c.b16 %v114, %v113
    %v133 = vunpack.c.l.b16 %v95
    %v134 = vunpack.c.l.b16 %v96
    %v135 = vunpack.c.l.b16 %v97
    %v136 = vunpack.c.l.b16 %v98
    %v137 = vunpack.c.l.b16 %v99
    %v138 = vunpack.c.l.b16 %v100
    %v139 = vunpack.c.l.b16 %v101
    %v140 = vunpack.c.l.b16 %v102
    %v141 = vunpack.c.l.b16 %v103
    %v142 = vunpack.c.l.b16 %v104
    %v143 = vunpack.c.l.b16 %v105
    %v144 = vunpack.c.l.b16 %v106
    %v145 = vunpack.c.l.b16 %v107
    %v146 = vunpack.c.l.b16 %v108
    %v147 = vunpack.c.l.b16 %v109
    %v148 = vunpack.c.l.b16 %v110
    %v149 = vpack.c.b16 %v134, %v133
    %v150 = vpack.c.b16 %v136, %v135
    %v151 = vpack.c.b16 %v138, %v137
    %v152 = vpack.c.b16 %v140, %v139
    %v153 = vpack.c.b16 %v142, %v141
    %v154 = vpack.c.b16 %v144, %v143
    %v155 = vpack.c.b16 %v146, %v145
    %v156 = vpack.c.b16 %v148, %v147
    %165 = vmatpush.bf16.xpose.msra.mxu0 %v156
    %166 = vmatpush.bf16.xpose.msra.mxu0 %v155
    %167 = vmatpush.bf16.xpose.msra.mxu0 %v154
    %168 = vmatpush.bf16.xpose.msra.mxu0 %v153
    %169 = vmatpush.bf16.xpose.msra.mxu0 %v152
    %170 = vmatpush.bf16.xpose.msra.mxu0 %v151
    %171 = vmatpush.bf16.xpose.msra.mxu0 %v150
    %172 = vmatpush.bf16.xpose.msra.mxu0 %v149
    %173 = vmatmul.bf16.gmra.mxu0 %v115
    %v174 = vpop.f32.mrf.mxu0
    %v175 = vadd.f32 0.0, %v174
    %v176 = vpop.f32.mrf.mxu0
    %v177 = vadd.f32 0.0, %v176
    %178 = vdwg.mxu0
    %v179 = vld [vmem:[#allocation8] sm:$0xff]
    %v180 = vld [vmem:[#allocation8 + $0x8] sm:$0xff]
    %v181 = vlaneseq
    %v182 = vand.u32 %v181, 127
    %183 = vset.pattern.permute.xlu0 0
    %184 = vperm.xlu0 %183, %v179
    %v185 = vpop.permute.xlu0 %184
    %186 = vset.pattern.permute.xlu0 0
    %187 = vperm.xlu0 %186, %v180
    %v188 = vpop.permute.xlu0 %187
    %vm189 = vcmp.eq.s32.totalorder %v182, %v185
    %vm190 = vcmp.eq.s32.totalorder %v182, %v188
    %v191 = vsel %vm189, 1, 0
    %v192 = vsel %vm190, 1, 0
    %v193 = vcvt.s32.f32 %v191
    %v194 = vcvt.s32.f32 %v192
    %v195 = vadd.f32 %v193, 0.0
    %v196 = vadd.f32 %v194, 0.0
    %197 = vset.pattern.permute.xlu0 1
    %198 = vperm.xlu0 %197, %v179
    %v199 = vpop.permute.xlu0 %198
    %200 = vset.pattern.permute.xlu0 1
    %201 = vperm.xlu0 %200, %v180
    %v202 = vpop.permute.xlu0 %201
    %vm203 = vcmp.eq.s32.totalorder %v182, %v199
    %vm204 = vcmp.eq.s32.totalorder %v182, %v202
    %v205 = vsel %vm203, 1, 0
    %v206 = vsel %vm204, 1, 0
    %v207 = vcvt.s32.f32 %v205
    %v208 = vcvt.s32.f32 %v206
    %v209 = vadd.f32 %v195, %v207
    %v210 = vadd.f32 %v196, %v208
    %211 = vset.pattern.permute.xlu0 2
    %212 = vperm.xlu0 %211, %v179
    %v213 = vpop.permute.xlu0 %212
    %214 = vset.pattern.permute.xlu0 2
    %215 = vperm.xlu0 %214, %v180
    %v216 = vpop.permute.xlu0 %215
    %vm217 = vcmp.eq.s32.totalorder %v182, %v213
    %vm218 = vcmp.eq.s32.totalorder %v182, %v216
    %v219 = vsel %vm217, 1, 0
    %v220 = vsel %vm218, 1, 0
    %v221 = vcvt.s32.f32 %v219
    %v222 = vcvt.s32.f32 %v220
    %v223 = vadd.f32 %v209, %v221
    %v224 = vadd.f32 %v210, %v222
    %225 = vset.pattern.permute.xlu0 3
    %226 = vperm.xlu0 %225, %v179
    %v227 = vpop.permute.xlu0 %226
    %228 = vset.pattern.permute.xlu0 3
    %229 = vperm.xlu0 %228, %v180
    %v230 = vpop.permute.xlu0 %229
    %vm231 = vcmp.eq.s32.totalorder %v182, %v227
    %vm232 = vcmp.eq.s32.totalorder %v182, %v230
    %v233 = vsel %vm231, 1, 0
    %v234 = vsel %vm232, 1, 0
    %v235 = vcvt.s32.f32 %v233
    %v236 = vcvt.s32.f32 %v234
    %v237 = vadd.f32 %v223, %v235
    %v238 = vadd.f32 %v224, %v236
    %239 = vset.pattern.permute.xlu0 4
    %240 = vperm.xlu0 %239, %v179
    %v241 = vpop.permute.xlu0 %240
    %242 = vset.pattern.permute.xlu0 4
    %243 = vperm.xlu0 %242, %v180
    %v244 = vpop.permute.xlu0 %243
    %vm245 = vcmp.eq.s32.totalorder %v182, %v241
    %vm246 = vcmp.eq.s32.totalorder %v182, %v244
    %v247 = vsel %vm245, 1, 0
    %v248 = vsel %vm246, 1, 0
    %v249 = vcvt.s32.f32 %v247
    %v250 = vcvt.s32.f32 %v248
    %v251 = vadd.f32 %v237, %v249
    %v252 = vadd.f32 %v238, %v250
    %253 = vset.pattern.permute.xlu0 5
    %254 = vperm.xlu0 %253, %v179
    %v255 = vpop.permute.xlu0 %254
    %256 = vset.pattern.permute.xlu0 5
    %257 = vperm.xlu0 %256, %v180
    %v258 = vpop.permute.xlu0 %257
    %vm259 = vcmp.eq.s32.totalorder %v182, %v255
    %vm260 = vcmp.eq.s32.totalorder %v182, %v258
    %v261 = vsel %vm259, 1, 0
    %v262 = vsel %vm260, 1, 0
    %v263 = vcvt.s32.f32 %v261
    %v264 = vcvt.s32.f32 %v262
    %v265 = vadd.f32 %v251, %v263
    %v266 = vadd.f32 %v252, %v264
    %267 = vset.pattern.permute.xlu0 6
    %268 = vperm.xlu0 %267, %v179
    %v269 = vpop.permute.xlu0 %268
    %270 = vset.pattern.permute.xlu0 6
    %271 = vperm.xlu0 %270, %v180
    %v272 = vpop.permute.xlu0 %271
    %vm273 = vcmp.eq.s32.totalorder %v182, %v269
    %vm274 = vcmp.eq.s32.totalorder %v182, %v272
    %v275 = vsel %vm273, 1, 0
    %v276 = vsel %vm274, 1, 0
    %v277 = vcvt.s32.f32 %v275
    %v278 = vcvt.s32.f32 %v276
    %v279 = vadd.f32 %v265, %v277
    %v280 = vadd.f32 %v266, %v278
    %281 = vset.pattern.permute.xlu0 7
    %282 = vperm.xlu0 %281, %v179
    %v283 = vpop.permute.xlu0 %282
    %284 = vset.pattern.permute.xlu0 7
    %285 = vperm.xlu0 %284, %v180
    %v286 = vpop.permute.xlu0 %285
    %vm287 = vcmp.eq.s32.totalorder %v182, %v283
    %vm288 = vcmp.eq.s32.totalorder %v182, %v286
    %v289 = vsel %vm287, 1, 0
    %v290 = vsel %vm288, 1, 0
    %v291 = vcvt.s32.f32 %v289
    %v292 = vcvt.s32.f32 %v290
    %v293 = vadd.f32 %v279, %v291
    %v294 = vadd.f32 %v280, %v292
    %295 = vset.pattern.permute.xlu0 8
    %296 = vperm.xlu0 %295, %v179
    %v297 = vpop.permute.xlu0 %296
    %298 = vset.pattern.permute.xlu0 8
    %299 = vperm.xlu0 %298, %v180
    %v300 = vpop.permute.xlu0 %299
    %vm301 = vcmp.eq.s32.totalorder %v182, %v297
    %vm302 = vcmp.eq.s32.totalorder %v182, %v300
    %v303 = vsel %vm301, 1, 0
    %v304 = vsel %vm302, 1, 0
    %v305 = vcvt.s32.f32 %v303
    %v306 = vcvt.s32.f32 %v304
    %v307 = vadd.f32 %v293, %v305
    %v308 = vadd.f32 %v294, %v306
    %309 = vset.pattern.permute.xlu0 9
    %310 = vperm.xlu0 %309, %v179
    %v311 = vpop.permute.xlu0 %310
    %312 = vset.pattern.permute.xlu0 9
    %313 = vperm.xlu0 %312, %v180
    %v314 = vpop.permute.xlu0 %313
    %vm315 = vcmp.eq.s32.totalorder %v182, %v311
    %vm316 = vcmp.eq.s32.totalorder %v182, %v314
    %v317 = vsel %vm315, 1, 0
    %v318 = vsel %vm316, 1, 0
    %v319 = vcvt.s32.f32 %v317
    %v320 = vcvt.s32.f32 %v318
    %v321 = vadd.f32 %v307, %v319
    %v322 = vadd.f32 %v308, %v320
    %vm323 = vcmp.gt.f32.partialorder %v321, 0.0
    %vm324 = vcmp.gt.f32.partialorder %v322, 0.0
    %v325 = vsel %vm323, %v175, -1e+30
    %v326 = vsel %vm324, %v177, -1e+30
    %327 = vmax.xlane.f32.xlu0 %v325
    %v328 = vpop.xlane.xlu0 %327
    %329 = vmax.xlane.f32.xlu0 %v326
    %v330 = vpop.xlane.xlu0 %329
    %v331 = vmax.f32 %v92, %v328
    %v332 = vmax.f32 %v94, %v330
    %v333 = vsub.f32 %v325, %v331
    %v334 = vsub.f32 %v326, %v332
    %v335 = vmul.f32 %v333, 2.0
    %v336 = vmul.f32 %v334, 2.0
    %v337 = vmul.f32 %v335, 1.442695
    %v338 = vpow.pop %v337
    %v339 = vmul.f32 %v336, 1.442695
    %v340 = vpow.pop %v339
    %v341 = vmul.f32 %v321, %v338
    %v342 = vmul.f32 %v322, %v340
    %v343 = vsub.f32 %v92, %v331
    %v344 = vsub.f32 %v94, %v332
    %v345 = vmul.f32 %v343, 2.0
    %v346 = vmul.f32 %v344, 2.0
    %v347 = vmul.f32 %v345, 1.442695
    %v348 = vpow.pop %v347
    %v349 = vmul.f32 %v346, 1.442695
    %v350 = vpow.pop %v349
    %351 = vadd.xlane.f32.xlu0 %v341
    %v352 = vpop.xlane.xlu0 %351
    %353 = vadd.xlane.f32.xlu0 %v342
    %v354 = vpop.xlane.xlu0 %353
    %v355 = vadd.f32 %v348, %v352
    %v356 = vadd.f32 %v350, %v354
    %v357 = vsub.f32 %v331, %v92
    %v358 = vsub.f32 %v332, %v94
    %v359 = vmul.f32 %v357, 2.0
    %v360 = vmul.f32 %v358, 2.0
    %v361 = vlog2.pop %v355
    %v362 = vmul.f32 %v361, 0.6931472
    %v363 = vlog2.pop %v356
    %v364 = vmul.f32 %v363, 0.6931472
    %v365 = vadd.f32 %v359, %v362
    %v366 = vadd.f32 %v360, %v364
    %s367 = smul.u32 0, 16
    %v368 = vlaneseq
    %v369 = vshrl.u32 %v368, 7
    %v370 = vadd.s32 %v369, 8
    %v371 = vstv %s367
    %v372 = vadd.s32 %v371, %v369
    %v373 = vadd.s32 %v371, %v370
    %vm374 = vcmp.lt.s32.totalorder %v372, 8
    %vm375 = vcmp.lt.s32.totalorder %v373, 8
    %v376 = vsel %vm374, 1, 0
    %v377 = vsel %vm375, 1, 0
    %v378 = vcvt.s32.f32 %v376
    %v379 = vcvt.s32.f32 %v377
    %v380 = vmul.f32 %v365, %v378
    %v381 = vmul.f32 %v366, %v379
    %vm382 = vcmask 7168
    %v383 = vsel %vm382, %v380, 0.0
    %v384 = vsel %vm382, %v381, 0.0
    %v385 = vadd.f32 %v383, %v384
    %386 = vadd.xlane.f32.xlu0 %v385
    %v387 = vpop.xlane.xlu0 %386
    %v388 = vrot.slane %v387, 4
    %v389 = vadd.f32 %v387, %v388
    %v390 = vrot.slane %v389, 2
    %v391 = vadd.f32 %v389, %v390
    %v392 = vrot.slane %v391, 1
    %v393 = vadd.f32 %v391, %v392
    %s394 = vtos %v393
    %v395 = vstv %s394
    %v396 = vadd.f32 %v395, 0.0
    %vm397 = vcmask 0
    %398 = vst.msk [vmem:[#allocation10] sm:$0x1] %vm397, %v396
    // Predicated region
    $region34: #{tpu_custom_call.1} parent=1 // pred_check
      _
    $region35: #{tpu_custom_call.1} parent=1 // pred_check_branch
      %400 = sbr.rel (0) target = $region37
    $region36: #{tpu_custom_call.1} parent=1 // pred_region
      %402 = vsyncadd [#allocation4], 0
      %s404 = sshll.u32 [#allocation10], 4
      %s405 = int_to_ptr.vmem [resolvable:$true] %s404
      %s406 = sshll.u32 %s4, 4
      %s407 = int_to_ptr.hbm [resolvable:$true] %s406
      %409 = dma.vmem_to_hbm [thread:$0]  %s405, 16, %s407, [#allocation4]
    $region37: #{tpu_custom_call.1} parent=1 // pred_fallthru
      _
    // Predicated region
    $region38: #{tpu_custom_call.1} parent=1 // pred_check
      _
    $region39: #{tpu_custom_call.1} parent=1 // pred_check_branch
      %411 = sbr.rel (0) target = $region41
    $region40: #{tpu_custom_call.1} parent=1 // pred_region
      %413 = dma.done [#allocation4], 16
    $region41: #{tpu_custom_call.1} parent=1 // pred_fallthru
      _
    %414 = vsyncpa [#allocation3], 1
    %415 = vsyncpa [#allocation6], 1
    %416 = vsyncpa [#allocation9], 1
    %417 = vsyncpa [#allocation4], 1

</llo_original>
